<compile_context>
chip_gen: v7x
topology: tpu7x:2x2x1
jax: 0.10.0
libtpu: 0.0.40
codegen_flags: <defaults>
</compile_context>

<pallas_src>
import functools

import numpy as np
import jax
import jax.numpy as jnp
from jax.experimental import pallas as pl
from jax.experimental.pallas import tpu as pltpu


# ----------------------------------------------------------------------------- helpers

def _cdiv(a, b):
    return -(-a // b)


def _round_up(x, m):
    return ((x + m - 1) // m) * m


def _sublane_multiple(itemsize):
    if itemsize >= 4:
        return 8
    if itemsize == 2:
        return 16
    return 32


def _vmem_capacity_bytes():
    # Trace-time hardware query; fall back to the smallest generation (v7x, 64 MiB)
    # so a wrong guess can only be conservative.
    try:
        return int(pltpu.get_tpu_info().vmem_capacity_bytes)
    except Exception:
        return 64 * 1024 * 1024


def _apply_epilogue(y, b_ref, activation, has_bias):
    # y is the f32 (tile) result already scaled by weight_gain.
    if has_bias:
        y = y + b_ref[...]  # (1, tn) f32, pre-scaled by bias_gain (incl. act gain)
    if activation == "lrelu":
        y = jnp.where(y >= 0, y, jnp.float32(0.2) * y)
    elif activation == "relu":
        y = jnp.maximum(y, jnp.float32(0.0))
    # 'linear': nothing.  sqrt(2) gain for relu/lrelu is folded into the gains.
    return y


# ----------------------------------------------------------------------------- kernels

def _fc_resident_kernel(x_ref, w_ref, *rest, weight_gain, activation, has_bias):
    # x_ref: (tm, K)   w_ref: (K, N)   [b_ref: (1, N)]   o_ref: (tm, N)
    if has_bias:
        b_ref, o_ref = rest
    else:
        b_ref = None
        (o_ref,) = rest
    y = jnp.dot(x_ref[...], w_ref[...], preferred_element_type=jnp.float32)
    y = y * jnp.float32(weight_gain)
    y = _apply_epilogue(y, b_ref, activation, has_bias)
    o_ref[...] = y.astype(o_ref.dtype)


def _fc_streaming_kernel(x_ref, w_ref, *rest, weight_gain, activation, has_bias):
    # x_ref: (tm, tk)   w_ref: (tk, tn)   [b_ref: (1, tn)]   o_ref: (tm, tn)
    # acc_ref: (tm, tn) f32 scratch, resident across the K grid axis.
    if has_bias:
        b_ref, o_ref, acc_ref = rest
    else:
        b_ref = None
        o_ref, acc_ref = rest

    k = pl.program_id(2)

    @pl.when(k == 0)
    def _init():
        acc_ref[...] = jnp.zeros_like(acc_ref)

    acc_ref[...] += jnp.dot(x_ref[...], w_ref[...],
                            preferred_element_type=jnp.float32)

    @pl.when(k == pl.num_programs(2) - 1)
    def _epilogue():
        y = acc_ref[...] * jnp.float32(weight_gain)
        y = _apply_epilogue(y, b_ref, activation, has_bias)
        o_ref[...] = y.astype(o_ref.dtype)


# ----------------------------------------------------------------------------- wrapper

def fully_connected_layer(x, weight, bias=None, *, activation="linear",
                          lr_multiplier=1.0, compute_dtype=None,
                          tm=None, tn=None, tk=None, use_resident=None):
    """Pallas equivalent of FullyConnectedLayer.forward."""
    if activation not in ("linear", "lrelu", "relu"):
        # TODO(synk): other bias_act activations (sigmoid/tanh/swish/elu/...) not wired up
        raise NotImplementedError(activation)

    assert x.ndim == 2 and weight.ndim == 2
    M, K = x.shape
    N, K2 = weight.shape
    assert K == K2
    has_bias = bias is not None

    out_dtype = x.dtype
    osize = jnp.dtype(out_dtype).itemsize
    cdt = jnp.dtype(compute_dtype) if compute_dtype is not None else jnp.dtype(x.dtype)
    csize = cdt.itemsize
    sub = _sublane_multiple(csize)

    # Gains.  relu/lrelu are positively homogeneous, so the sqrt(2) bias_act gain
    # can be folded into weight_gain / bias_gain (removes one VPU mul per element).
    weight_gain = float(lr_multiplier) / float(np.sqrt(K))
    bias_gain = float(lr_multiplier)
    if activation in ("relu", "lrelu"):
        g = float(np.sqrt(2.0))
        weight_gain *= g
        bias_gain *= g

    vmem_cap = _vmem_capacity_bytes()

    # ---- M tiling (shared by both paths): full-extent or multiple of the sublane pack.
    tm_req = 512 if tm is None else int(tm)
    if M <= tm_req:
        tm_e = M
    else:
        tm_e = max(sub, (tm_req // sub) * sub)

    # ---- resident fast-path decision: whole (K, N) weight kept in VMEM.
    def _resident_footprint(tm_cur):
        fp = 2 * K * N * csize + 2 * tm_cur * K * csize + 2 * tm_cur * N * osize
        if has_bias:
            fp += 2 * N * 4
        return fp

    if use_resident is None:
        use_resident = (tn is None and tk is None
                        and _resident_footprint(tm_e) <= int(0.45 * vmem_cap))

    # Operands in compute dtype; weight transposed once to (K, N) so the kernel uses
    # the canonical (tm,tk)x(tk,tn) contraction (no per-step transpose).
    x_c = x if x.dtype == cdt else x.astype(cdt)
    w_t = jnp.transpose(weight, (1, 0)).astype(cdt)          # (K, N)
    b2d = None
    if has_bias:
        b2d = (bias.astype(jnp.float32) * jnp.float32(bias_gain)).reshape(1, N)

    if use_resident:
        # ---------------- fast path: grid over M only, single dot per tile ----------
        # Give both v7x TensorCores work when M would otherwise be a single tile.
        if _cdiv(M, tm_e) == 1 and M >= 256:
            tm_e = _round_up(_cdiv(M, 2), sub)

        grid = (_cdiv(M, tm_e),)
        in_specs = [
            pl.BlockSpec((tm_e, K), lambda i: (i, 0)),    # x row tile
            pl.BlockSpec((K, N), lambda i: (0, 0)),       # whole weight, DMA'd once
        ]
        inputs = [x_c, w_t]
        if has_bias:
            in_specs.append(pl.BlockSpec((1, N), lambda i: (0, 0)))
            inputs.append(b2d)
        out_specs = pl.BlockSpec((tm_e, N), lambda i: (i, 0))
        scratch_shapes = []
        dim_sem = ("parallel",)
        kernel = functools.partial(_fc_resident_kernel, weight_gain=weight_gain,
                                   activation=activation, has_bias=has_bias)
        footprint = _resident_footprint(tm_e)
        bytes_accessed = (M * K * csize + K * N * csize + M * N * osize
                          + (N * 4 if has_bias else 0))
    else:
        # ---------------- streaming path: 3-D grid with f32 accumulator -------------
        tn_req = 512 if tn is None else int(tn)
        tk_req = 1024 if tk is None else int(tk)

        if N <= tn_req:
            tn_e = N
        else:
            tn_e = max(128, (tn_req // 128) * 128)

        if K <= tk_req:
            tk_e = K
            K_pad = K
        else:
            # Pad K only to the next multiple of 128 and pick tk as a divisor of it,
            # so the zero-pad (needed for a correct reduction) is at most 127 columns.
            K_pad = _round_up(K, 128)
            tk_e = 128
            cand = max(128, (tk_req // 128) * 128)
            while cand >= 128:
                if K_pad % cand == 0:
                    tk_e = cand
                    break
                cand -= 128

        # v7x has 2 TensorCores; make sure at least one parallel axis has >=2 blocks.
        if _cdiv(M, tm_e) == 1 and _cdiv(N, tn_e) == 1 and N >= 256:
            tn_e = _round_up(_cdiv(N, 2), 128)

        if K_pad != K:
            x_c = jnp.pad(x_c, ((0, 0), (0, K_pad - K)))
            w_t = jnp.pad(w_t, ((0, K_pad - K), (0, 0)))

        grid = (_cdiv(M, tm_e), _cdiv(N, tn_e), K_pad // tk_e)
        in_specs = [
            pl.BlockSpec((tm_e, tk_e), lambda i, j, k: (i, k)),
            pl.BlockSpec((tk_e, tn_e), lambda i, j, k: (k, j)),
        ]
        inputs = [x_c, w_t]
        if has_bias:
            in_specs.append(pl.BlockSpec((1, tn_e), lambda i, j, k: (0, j)))
            inputs.append(b2d)
        out_specs = pl.BlockSpec((tm_e, tn_e), lambda i, j, k: (i, j))
        scratch_shapes = [pltpu.VMEM((tm_e, tn_e), jnp.float32)]
        dim_sem = ("parallel", "parallel", "arbitrary")
        kernel = functools.partial(_fc_streaming_kernel, weight_gain=weight_gain,
                                   activation=activation, has_bias=has_bias)
        footprint = (2 * tm_e * tk_e * csize + 2 * tk_e * tn_e * csize
                     + 2 * tm_e * tn_e * osize + tm_e * tn_e * 4
                     + (2 * tn_e * 4 if has_bias else 0))
        gi, gj, gk = grid
        bytes_accessed = (gi * gj * gk * tm_e * tk_e * csize        # x (revisited per N tile)
                          + gi * gj * gk * tk_e * tn_e * csize      # w (revisited per M tile)
                          + gi * gj * tm_e * tn_e * osize           # out written once
                          + (gi * gj * tn_e * 4 if has_bias else 0))

    vmem_limit = int(min(max(footprint + (8 << 20), 32 << 20), int(0.75 * vmem_cap)))

    out = pl.pallas_call(
        kernel,
        out_shape=jax.ShapeDtypeStruct((M, N), out_dtype),
        grid_spec=pltpu.PrefetchScalarGridSpec(
            num_scalar_prefetch=0,
            grid=grid,
            in_specs=in_specs,
            out_specs=out_specs,
            scratch_shapes=scratch_shapes,
        ),
        compiler_params=pltpu.CompilerParams(
            dimension_semantics=dim_sem,
            vmem_limit_bytes=vmem_limit),
        cost_estimate=pl.CostEstimate(
            flops=2 * M * N * K,
            transcendentals=0,
            bytes_accessed=int(bytes_accessed)),
    )(*inputs)
    return out


# ----------------------------------------------------------------------------- reference

def fully_connected_ref(x, weight, bias, *, activation="linear", lr_multiplier=1.0):
    weight_gain = lr_multiplier / np.sqrt(x.shape[1])
    w = weight.astype(x.dtype) * weight_gain
    y = x @ w.T
    if bias is not None:
        y = y + (bias.astype(x.dtype) * lr_multiplier)[None, :]
    if activation == "lrelu":
        y = jnp.where(y >= 0, y, 0.2 * y) * np.sqrt(2.0)
    elif activation == "relu":
        y = jnp.maximum(y, 0.0) * np.sqrt(2.0)
    return y


# ----------------------------------------------------------------------------- main

if __name__ == "__main__":
    key = jax.random.PRNGKey(0)
    k1, k2, k3, k4, k5, k6 = jax.random.split(key, 6)

    # ---- Fast (weight-resident) path on small, ragged shapes (exercises full-dim
    #      blocks, bias / no-bias, linear / lrelu).
    batch, in_features, out_features = 12, 96, 72
    x = jax.random.normal(k1, (batch, in_features), dtype=jnp.float32)
    weight = jax.random.normal(k2, (out_features, in_features), dtype=jnp.float32)
    bias = 0.1 * jax.random.normal(k3, (out_features,), dtype=jnp.float32)

    y_lin = fully_connected_layer(x, weight, bias, activation="linear")
    jax.block_until_ready(y_lin)
    y_lin_ref = fully_connected_ref(x, weight, bias, activation="linear")
    np.testing.assert_allclose(np.asarray(y_lin), np.asarray(y_lin_ref),
                               rtol=1e-4, atol=1e-4)

    y_act = fully_connected_layer(x, weight, bias, activation="lrelu")
    jax.block_until_ready(y_act)
    y_act_ref = fully_connected_ref(x, weight, bias, activation="lrelu")
    np.testing.assert_allclose(np.asarray(y_act), np.asarray(y_act_ref),
                               rtol=1e-4, atol=1e-4)

    y_nb = fully_connected_layer(x, weight, None, activation="linear")
    jax.block_until_ready(y_nb)
    y_nb_ref = fully_connected_ref(x, weight, None, activation="linear")
    np.testing.assert_allclose(np.asarray(y_nb), np.asarray(y_nb_ref),
                               rtol=1e-4, atol=1e-4)

    # ---- Streaming (K-accumulation) path, forced, with ragged M/N, a partial N tile
    #      and a zero-padded K tail (K=200 -> K_pad=256, tk=128), lr_multiplier != 1.
    M2, K2, N2 = 24, 200, 136
    x2 = jax.random.normal(k4, (M2, K2), dtype=jnp.float32)
    w2 = jax.random.normal(k5, (N2, K2), dtype=jnp.float32) / 0.5
    b2 = 0.05 * jax.random.normal(k6, (N2,), dtype=jnp.float32)
    y2 = fully_connected_layer(x2, w2, b2, activation="lrelu", lr_multiplier=0.5,
                               tk=128, tn=128, use_resident=False)
    jax.block_until_ready(y2)
    y2_ref = fully_connected_ref(x2, w2, b2, activation="lrelu", lr_multiplier=0.5)
    np.testing.assert_allclose(np.asarray(y2), np.asarray(y2_ref),
                               rtol=1e-4, atol=1e-4)

    # ---- Optional bf16 compute path (f32 accumulation, f32 output), loose tolerance.
    y_bf = fully_connected_layer(x, weight, bias, activation="linear",
                                 compute_dtype=jnp.bfloat16)
    jax.block_until_ready(y_bf)
    np.testing.assert_allclose(np.asarray(y_bf), np.asarray(y_lin_ref),
                               rtol=5e-2, atol=5e-2)

    print("KERNEL_OK")
</pallas_src>

<mosaic_0001>
module attributes {stable_mosaic.version = 11 : i64} {
  func.func @_fc_resident_kernel(%arg0: i32, %arg1: memref<12x96xf32, #tpu.memory_space<vmem>>, %arg2: memref<96x72xf32, #tpu.memory_space<vmem>>, %arg3: memref<1x72xf32, #tpu.memory_space<vmem>>, %arg4: memref<12x72xf32, #tpu.memory_space<vmem>>) attributes {dimension_semantics = [#tpu.dimension_semantics<parallel>], iteration_bounds = array<i64: 1>, scalar_prefetch = 0 : i64, scratch_operands = 0 : i64, tpu.core_type = #tpu.core_type<tc>, window_params = [{transform_indices = @transform_0, window_bounds = array<i64: 12, 96>}, {pipeline_mode = #tpu.pipeline_mode<synchronous>, transform_indices = @transform_1, window_bounds = array<i64: 96, 72>}, {pipeline_mode = #tpu.pipeline_mode<synchronous>, transform_indices = @transform_2, window_bounds = array<i64: 1, 72>}, {transform_indices = @transform_3, window_bounds = array<i64: 12, 72>}]} {
    %c0 = arith.constant 0 : index
    %c0_0 = arith.constant 0 : index
    %0 = vector.load %arg1[%c0, %c0_0] : memref<12x96xf32, #tpu.memory_space<vmem>>, vector<12x96xf32>
    %c0_1 = arith.constant 0 : index
    %c0_2 = arith.constant 0 : index
    %1 = vector.load %arg2[%c0_1, %c0_2] : memref<96x72xf32, #tpu.memory_space<vmem>>, vector<96x72xf32>
    %cst = arith.constant dense<0.000000e+00> : vector<12x72xf32>
    %2 = tpu.matmul %0, %1, %cst {dimension_numbers = #tpu.dot_dimension_numbers<[1], [0], [0], [1], [0, 0, 1, 1], [], []>} : vector<12x96xf32>, vector<96x72xf32>, vector<12x72xf32> -> vector<12x72xf32>
    %cst_3 = arith.constant 0.102062076 : f32
    %3 = vector.broadcast %cst_3 : f32 to vector<12x72xf32>
    %4 = arith.mulf %2, %3 : vector<12x72xf32>
    %c0_4 = arith.constant 0 : index
    %c0_5 = arith.constant 0 : index
    %5 = vector.load %arg3[%c0_4, %c0_5] : memref<1x72xf32, #tpu.memory_space<vmem>>, vector<1x72xf32>
    %6 = vector.broadcast %5 : vector<1x72xf32> to vector<12x72xf32>
    %7 = arith.addf %4, %6 : vector<12x72xf32>
    %c0_6 = arith.constant 0 : index
    %c0_7 = arith.constant 0 : index
    %8 = vector.load %arg4[%c0_6, %c0_7] : memref<12x72xf32, #tpu.memory_space<vmem>>, vector<12x72xf32>
    tpu.vector_store %arg4[%c0_6, %c0_7], %7 {strides = array<i32>} : memref<12x72xf32, #tpu.memory_space<vmem>>, vector<12x72xf32>,
    return
  }
  func.func @transform_0(%arg0: i32) -> (i32, i32) {
    %c0_i32 = arith.constant 0 : i32
    %c0_i32_0 = arith.constant 0 : i32
    return %arg0, %c0_i32 : i32, i32
  }
  func.func @transform_1(%arg0: i32) -> (i32, i32) {
    %c0_i32 = arith.constant 0 : i32
    %c0_i32_0 = arith.constant 0 : i32
    %c0_i32_1 = arith.constant 0 : i32
    return %c0_i32, %c0_i32_0 : i32, i32
  }
  func.func @transform_2(%arg0: i32) -> (i32, i32) {
    %c0_i32 = arith.constant 0 : i32
    %c0_i32_0 = arith.constant 0 : i32
    %c0_i32_1 = arith.constant 0 : i32
    return %c0_i32, %c0_i32_0 : i32, i32
  }
  func.func @transform_3(%arg0: i32) -> (i32, i32) {
    %c0_i32 = arith.constant 0 : i32
    %c0_i32_0 = arith.constant 0 : i32
    return %arg0, %c0_i32 : i32, i32
  }
}

</mosaic_0001>

<llo_original>
// kernel: tpu_custom_call.1
$region0: #{tpu_custom_call.1}
  #allocation0 [shape = 'u32[]', space=smem, size = 0x4, offset = 0x4, fixed_abs, tag = 'smem constant byte address 0x4 - core index']
  #allocation1 [shape = 'u32[144,128]{1,0:T(1,128)}', space=vmem, size = 0x12000, scoped, tag = 'internal scratch']
  %s0 = inlined_call_operand.vmem [shape: f32[12,96], index: 0, kind: input, shape index: {}]
  %s1 = inlined_call_operand.vmem [shape: f32[96,72], index: 1, kind: input, shape index: {}]
  %s2 = inlined_call_operand.vmem [shape: f32[1,72], index: 2, kind: input, shape index: {}]
  %s3 = inlined_call_operand.hbm [shape: f32[12,72], index: 3, kind: output, shape index: {}]
  %s4 = sld [smem:[#allocation0]]
  $region22: #{tpu_custom_call.1} parent=0
    _
  %s6 = ssub.s32 1, %s4
  %s7 = scalar_select 0, %s6, %s4
  $region1: #{tpu_custom_call.1} parent=0
    #allocation2 [shape = 'u8[8192]{0}', space=vmem, size = 0x2000, scoped, tag = 'output window, operand 0, single buffered']
    #allocation3 [shape = 's32[1]{0}', space=sflag, size = 0x4, scoped, tag = 'scoped memory for tpu_custom_call.1']
    %8 = vsyncpa [#allocation3], 0
    // Predicated region
    $region2: #{tpu_custom_call.1} parent=1 // pred_check
      _
    $region3: #{tpu_custom_call.1} parent=1 // pred_check_branch
      %10 = sbr.rel (0) target = $region5
    $region4: #{tpu_custom_call.1} parent=1 // pred_region
      _
    $region5: #{tpu_custom_call.1} parent=1 // pred_fallthru
      _
    // Predicated region
    $region6: #{tpu_custom_call.1} parent=1 // pred_check
      _
    $region7: #{tpu_custom_call.1} parent=1 // pred_check_branch
      %12 = sbr.rel (0) target = $region9
    $region8: #{tpu_custom_call.1} parent=1 // pred_region
      _
    $region9: #{tpu_custom_call.1} parent=1 // pred_fallthru
      _
    // Predicated region
    $region10: #{tpu_custom_call.1} parent=1 // pred_check
      _
    $region11: #{tpu_custom_call.1} parent=1 // pred_check_branch
      %14 = sbr.rel (0) target = $region13
    $region12: #{tpu_custom_call.1} parent=1 // pred_region
      _
    $region13: #{tpu_custom_call.1} parent=1 // pred_fallthru
      _
    %v15 = vld [vmem:[%s0] sm:$0xff]
    %v16 = vld [vmem:[%s0 + $0x8] sm:$0xf]
    %v17 = vld [vmem:[%s1] sm:$0xff]
    %v18 = vld [vmem:[%s1 + $0x8] sm:$0xff]
    %v19 = vld [vmem:[%s1 + $0x10] sm:$0xff]
    %v20 = vld [vmem:[%s1 + $0x18] sm:$0xff]
    %v21 = vld [vmem:[%s1 + $0x20] sm:$0xff]
    %v22 = vld [vmem:[%s1 + $0x28] sm:$0xff]
    %v23 = vld [vmem:[%s1 + $0x30] sm:$0xff]
    %v24 = vld [vmem:[%s1 + $0x38] sm:$0xff]
    %v25 = vld [vmem:[%s1 + $0x40] sm:$0xff]
    %v26 = vld [vmem:[%s1 + $0x48] sm:$0xff]
    %v27 = vld [vmem:[%s1 + $0x50] sm:$0xff]
    %v28 = vld [vmem:[%s1 + $0x58] sm:$0xff]
    %vm29 = vcmask 785408
    %v31 = vsel %vm29, %v15, 0
    %v34 = vsel %vm29, %v16, 0
    %36 = vmatprep.subr.mxu0 0.0
    %37 = vmatpush1.msra.mxu0 %v17
    %38 = vmatprep.subr.mxu0 0.0
    %39 = vmatpush1.msra.mxu0 %v18
    %40 = vmatprep.subr.mxu0 0.0
    %41 = vmatpush1.msra.mxu0 %v19
    %42 = vmatprep.subr.mxu0 0.0
    %43 = vmatpush1.msra.mxu0 %v20
    %44 = vmatprep.subr.mxu0 0.0
    %45 = vmatpush1.msra.mxu0 %v21
    %46 = vmatprep.subr.mxu0 0.0
    %47 = vmatpush1.msra.mxu0 %v22
    %48 = vmatprep.subr.mxu0 0.0
    %49 = vmatpush1.msra.mxu0 %v23
    %50 = vmatprep.subr.mxu0 0.0
    %51 = vmatpush1.msra.mxu0 %v24
    %52 = vmatprep.subr.mxu0 0.0
    %53 = vmatpush1.msra.mxu0 %v25
    %54 = vmatprep.subr.mxu0 0.0
    %55 = vmatpush1.msra.mxu0 %v26
    %56 = vmatprep.subr.mxu0 0.0
    %57 = vmatpush1.msra.mxu0 %v27
    %58 = vmatprep.subr.mxu0 0.0
    %59 = vmatpush1.msra.mxu0 %v28
    %60 = vmatprep.subr.mxu0 0.0
    %61 = vmatpush1.msra.mxu0 0.0
    %62 = vmatprep.subr.mxu0 0.0
    %63 = vmatpush1.msra.mxu0 0.0
    %64 = vmatprep.subr.mxu0 0.0
    %65 = vmatpush1.msra.mxu0 0.0
    %66 = vmatprep.subr.mxu0 0.0
    %67 = vmatpush1.msra.mxu0 0.0
    %68 = vmatprep.subr.mxu0 0.0
    %69 = vmatpush1.msra.mxu0 0.0
    %70 = vmatprep.subr.mxu0 0.0
    %71 = vmatpush1.msra.mxu0 0.0
    %72 = vmatprep.subr.mxu0 0.0
    %73 = vmatpush1.msra.mxu0 0.0
    %74 = vmatprep.subr.mxu0 0.0
    %75 = vmatpush1.msra.mxu0 0.0
    %76 = vmatprep.subr.mxu0 0.0
    %77 = vmatpush1.msra.mxu0 0.0
    %78 = vmatprep.subr.mxu0 0.0
    %79 = vmatpush1.msra.mxu0 0.0
    %80 = vmatprep.subr.mxu0 0.0
    %81 = vmatpush1.msra.mxu0 0.0
    %82 = vmatprep.subr.mxu0 0.0
    %83 = vmatpush1.msra.mxu0 0.0
    %84 = vmatprep.subr.mxu0 0.0
    %85 = vmatpush1.msra.mxu0 0.0
    %86 = vmatprep.subr.mxu0 0.0
    %87 = vmatpush1.msra.mxu0 0.0
    %88 = vmatprep.subr.mxu0 0.0
    %89 = vmatpush1.msra.mxu0 0.0
    %90 = vmatprep.subr.mxu0 0.0
    %91 = vmatpush1.msra.mxu0 0.0
    %92 = vmatprep.subr.mxu0 0.0
    %93 = vmatpush1.msra.mxu0 0.0
    %94 = vmatprep.subr.mxu0 0.0
    %95 = vmatpush1.msra.mxu0 0.0
    %96 = vmatprep.subr.mxu0 0.0
    %97 = vmatpush1.msra.mxu0 0.0
    %98 = vmatprep.subr.mxu0 0.0
    %99 = vmatpush1.msra.mxu0 0.0
    %100 = vmatprep.mubr.f32.mxu0 0.0
    %101 = vmatmul.mubr.f32.gmra.mrb[0].mxu0 %v31
    %v102 = vpop.f32.mrb[0].mxu0
    %v103 = vadd.f32 0.0, %v102
    %v104 = vpop.f32.mrb[0].mxu0
    %105 = vmatprep.mubr.f32.mxu0 0.0
    %106 = vmatmul.mubr.f32.gmra.mrb[0].mxu0 %v34
    %v107 = vpop.f32.mrb[0].mxu0
    %v108 = vadd.f32 0.0, %v107
    %v109 = vpop.f32.mrb[0].mxu0
    %110 = vdwg.mxu0
    %v111 = vmul.f32 %v103, 0.10206208
    %v112 = vmul.f32 %v108, 0.10206208
    %v113 = vld [vmem:[%s2] sm:$0x1]
    %v115 = vlaneseq
    %v116 = vshrl.u32 %v115, 7
    %v117 = vsub.s32 0, %v116
    %v118 = vrot.slane %v113, %v117
    %v120 = vadd.f32 %v111, %v118
    %v121 = vadd.f32 %v112, %v118
    %vm122 = vcmask 588800
    %123 = vst.msk [vmem:[#allocation2] sm:$0xff] %vm122, %v120
    %vm124 = vcmask 584704
    %125 = vst.msk [vmem:[#allocation2 + $0x8] sm:$0xf] %vm124, %v121
    // Predicated region
    $region14: #{tpu_custom_call.1} parent=1 // pred_check
      _
    $region15: #{tpu_custom_call.1} parent=1 // pred_check_branch
      %127 = sbr.rel (0) target = $region17
    $region16: #{tpu_custom_call.1} parent=1 // pred_region
      %s129 = ssub.s32 256, 256
      %130 = vsyncadd [#allocation3], %s129
      %s131 = sshll.u32 [#allocation2], 4
      %s132 = int_to_ptr.vmem [resolvable:$true] %s131
      %137 = dma.vmem_to_hbm [thread:$0]  %s132, 256, %s3, [#allocation3], 128, 128, 8
    $region17: #{tpu_custom_call.1} parent=1 // pred_fallthru
      _
    // Predicated region
    $region18: #{tpu_custom_call.1} parent=1 // pred_check
      _
    $region19: #{tpu_custom_call.1} parent=1 // pred_check_branch
      %139 = sbr.rel (0) target = $region21
    $region20: #{tpu_custom_call.1} parent=1 // pred_region
      %140 = dma.done [#allocation3], 256
    $region21: #{tpu_custom_call.1} parent=1 // pred_fallthru
      _
    %141 = vsyncpa [#allocation3], 1

</llo_original>
